<compile_context>
chip_gen: v6e
topology: v6e:2x2x1
jax: 0.10.0
libtpu: 0.0.40
codegen_flags: <defaults>
</compile_context>

<pallas_src>
import jax
import jax.numpy as jnp
from jax.experimental import pallas as pl
from jax.experimental.pallas import tpu as pltpu


def _round_up(x, m):
    return ((x + m - 1) // m) * m


def _patch_embed_kernel(x_ref, w_ref, b_ref, o_ref):
    # x_ref: (TM, K) patch tile, w_ref: (K, E) resident weight,
    # b_ref: (1, E) resident bias (f32), o_ref: (TM, E) output tile.
    acc = jnp.dot(x_ref[...], w_ref[...], preferred_element_type=jnp.float32)
    o_ref[...] = (acc + b_ref[...].astype(jnp.float32)).astype(o_ref.dtype)


def _pick_tile_m(n_rows, k, e_pad, in_bytes, out_bytes,
                 budget_bytes=24 << 20, tm_max=1024):
    """Largest TM (multiple of 8, <= tm_max) whose double-buffered working set
    (patch tile + output tile) plus the resident weight fits the VMEM budget.
    Budget is conservative for v7x (64 MiB physical / 32 MiB scoped)."""
    weight_bytes = 2 * k * e_pad * in_bytes  # weight may be double-buffered
    tm = _round_up(min(tm_max, n_rows), 8)
    while tm > 8:
        need = 2 * tm * k * in_bytes + 2 * tm * e_pad * out_bytes + weight_bytes
        if need <= budget_bytes:
            break
        tm = _round_up(tm // 2, 8)
    return max(tm, 8)


def patch_embed_matmul(patches, weight2d, bias, *, tile_m=None, out_dtype=None):
    """patches: (N, K); weight2d: (K, E); bias: (E,) f32. Returns (N, E)."""
    N, K = patches.shape
    Kw, E = weight2d.shape
    assert Kw == K
    out_dtype = out_dtype if out_dtype is not None else patches.dtype

    in_bytes = patches.dtype.itemsize
    out_bytes = jnp.dtype(out_dtype).itemsize

    # Lane-dense output: pad E up to a multiple of 128 (zero-padded weight/bias
    # columns contribute nothing; sliced off at the end).
    E_pad = _round_up(E, 128)

    if tile_m is None:
        tile_m = _pick_tile_m(_round_up(N, 8), K, E_pad, in_bytes, out_bytes)
    tile_m = _round_up(tile_m, 8)
    N_pad = _round_up(N, tile_m)
    grid_m = N_pad // tile_m

    if N_pad != N:
        patches = jnp.pad(patches, ((0, N_pad - N), (0, 0)))
    if E_pad != E:
        weight2d = jnp.pad(weight2d, ((0, 0), (0, E_pad - E)))
        bias = jnp.pad(bias, (0, E_pad - E))
    bias2d = bias.reshape(1, E_pad).astype(jnp.float32)

    cost = pl.CostEstimate(
        flops=2 * N * K * E,
        transcendentals=0,
        bytes_accessed=N * K * in_bytes + K * E * in_bytes + N * E * out_bytes,
    )

    out = pl.pallas_call(
        _patch_embed_kernel,
        out_shape=jax.ShapeDtypeStruct((N_pad, E_pad), out_dtype),
        grid_spec=pltpu.PrefetchScalarGridSpec(
            num_scalar_prefetch=0,
            grid=(grid_m,),
            in_specs=[
                # Patch tiles stream through VMEM (auto double-buffered).
                pl.BlockSpec((tile_m, K), lambda i: (i, 0)),
                # Weight & bias: constant block index -> stay resident in VMEM.
                pl.BlockSpec((K, E_pad), lambda i: (0, 0)),
                pl.BlockSpec((1, E_pad), lambda i: (0, 0)),
            ],
            out_specs=pl.BlockSpec((tile_m, E_pad), lambda i: (i, 0)),
        ),
        compiler_params=pltpu.CompilerParams(
            # Row tiles are independent -> shard the grid across TensorCores
            # on megacore parts (v7x); neutral on single-TC chips.
            dimension_semantics=("parallel",),
            vmem_limit_bytes=32 * 1024 * 1024,
        ),
        cost_estimate=cost,
    )(patches, weight2d, bias2d)

    return out[:N, :E]


def patch_embed_forward(x, conv_weight, conv_bias, patch_size, *,
                        compute_dtype=None, tile_m=None, return_tokens=False):
    """x: (B, C, H, W); conv_weight: (E, C, P, P); conv_bias: (E,).
    Returns (B, E, H//P, W//P) (PyTorch PatchEmbed.forward), or (B, Hp*Wp, E)
    tokens if return_tokens=True (skips the NCHW output transpose).
    compute_dtype=jnp.bfloat16 casts the matmul operands (f32 accumulation)."""
    B, C, H, W = x.shape
    P = patch_size
    E = conv_weight.shape[0]
    assert H % P == 0 and W % P == 0, "H/W must be divisible by patch_size"
    Hp, Wp = H // P, W // P

    # Patch extraction (XLA glue): (B,C,H,W) -> (B*Hp*Wp, C*P*P).
    # TODO(synk): fuse extraction into the kernel (NHWC strip BlockSpec) to
    # avoid one extra HBM round-trip of the input at large image sizes.
    patches = x.reshape(B, C, Hp, P, Wp, P).transpose(0, 2, 4, 1, 3, 5)
    patches = patches.reshape(B * Hp * Wp, C * P * P)

    # Conv weight (E, C, P, P) -> (C*P*P, E); flatten order matches patches.
    w2d = conv_weight.reshape(E, C * P * P).T

    if compute_dtype is not None:
        patches = patches.astype(compute_dtype)
        w2d = w2d.astype(compute_dtype)

    out = patch_embed_matmul(patches, w2d, conv_bias.astype(jnp.float32),
                             tile_m=tile_m, out_dtype=x.dtype)  # (B*Hp*Wp, E)

    if return_tokens:
        return out.reshape(B, Hp * Wp, E)                 # lane-dense tokens
    return out.reshape(B, Hp, Wp, E).transpose(0, 3, 1, 2)  # (B, E, Hp, Wp)


if __name__ == "__main__":
    # Small config consistent with the module: img_size=16, patch_size=4,
    # in_chans=4, embed_dim=32, batch=2.
    B, C, H, W = 2, 4, 16, 16
    P = 4
    E = 32

    key = jax.random.PRNGKey(0)
    kx, kw, kb = jax.random.split(key, 3)
    x = jax.random.normal(kx, (B, C, H, W), dtype=jnp.float32)
    conv_weight = jax.random.normal(kw, (E, C, P, P), dtype=jnp.float32) * 0.02
    conv_bias = jax.random.normal(kb, (E,), dtype=jnp.float32) * 0.02

    # Reference: XLA conv with the same semantics as nn.Conv2d(stride=kernel).
    ref = jax.lax.conv_general_dilated(
        x, conv_weight, window_strides=(P, P), padding="VALID",
        dimension_numbers=("NCHW", "OIHW", "NCHW")) + conv_bias.reshape(1, E, 1, 1)
    ref = jax.block_until_ready(ref)

    # 1) f32 path, small forced tile so the grid has >1 step (exercises the
    #    tiled / pipelined code path at toy sizes).
    out = patch_embed_forward(x, conv_weight, conv_bias, P, tile_m=8)
    out = jax.block_until_ready(out)
    assert out.shape == (B, E, H // P, W // P), out.shape
    assert jnp.allclose(out, ref, atol=1e-4, rtol=1e-4)

    # 2) bf16-operand path (f32 accumulation) with auto tile sizing.
    out_bf16 = patch_embed_forward(x, conv_weight, conv_bias, P,
                                   compute_dtype=jnp.bfloat16)
    out_bf16 = jax.block_until_ready(out_bf16)
    assert out_bf16.shape == ref.shape
    assert jnp.allclose(out_bf16, ref, atol=2e-2, rtol=2e-2)

    print("KERNEL_OK")
</pallas_src>

<mosaic_0001>
module attributes {stable_mosaic.version = 11 : i64} {
  func.func @_patch_embed_kernel(%arg0: i32, %arg1: memref<8x64xf32, #tpu.memory_space<vmem>>, %arg2: memref<64x128xf32, #tpu.memory_space<vmem>>, %arg3: memref<1x128xf32, #tpu.memory_space<vmem>>, %arg4: memref<8x128xf32, #tpu.memory_space<vmem>>) attributes {dimension_semantics = [#tpu.dimension_semantics<parallel>], iteration_bounds = array<i64: 4>, scalar_prefetch = 0 : i64, scratch_operands = 0 : i64, tpu.core_type = #tpu.core_type<tc>, window_params = [{transform_indices = @transform_0, window_bounds = array<i64: 8, 64>}, {pipeline_mode = #tpu.pipeline_mode<synchronous>, transform_indices = @transform_1, window_bounds = array<i64: 64, 128>}, {pipeline_mode = #tpu.pipeline_mode<synchronous>, transform_indices = @transform_2, window_bounds = array<i64: 1, 128>}, {transform_indices = @transform_3, window_bounds = array<i64: 8, 128>}]} {
    %c0 = arith.constant 0 : index
    %c0_0 = arith.constant 0 : index
    %0 = vector.load %arg1[%c0, %c0_0] : memref<8x64xf32, #tpu.memory_space<vmem>>, vector<8x64xf32>
    %c0_1 = arith.constant 0 : index
    %c0_2 = arith.constant 0 : index
    %1 = vector.load %arg2[%c0_1, %c0_2] : memref<64x128xf32, #tpu.memory_space<vmem>>, vector<64x128xf32>
    %cst = arith.constant dense<0.000000e+00> : vector<8x128xf32>
    %2 = tpu.matmul %0, %1, %cst {dimension_numbers = #tpu.dot_dimension_numbers<[1], [0], [0], [1], [0, 0, 1, 1], [], []>} : vector<8x64xf32>, vector<64x128xf32>, vector<8x128xf32> -> vector<8x128xf32>
    %c0_3 = arith.constant 0 : index
    %c0_4 = arith.constant 0 : index
    %3 = vector.load %arg3[%c0_3, %c0_4] : memref<1x128xf32, #tpu.memory_space<vmem>>, vector<1x128xf32>
    %4 = vector.broadcast %3 : vector<1x128xf32> to vector<8x128xf32>
    %5 = arith.addf %2, %4 : vector<8x128xf32>
    %c0_5 = arith.constant 0 : index
    %c0_6 = arith.constant 0 : index
    %6 = vector.load %arg4[%c0_5, %c0_6] : memref<8x128xf32, #tpu.memory_space<vmem>>, vector<8x128xf32>
    tpu.vector_store %arg4[%c0_5, %c0_6], %5 {strides = array<i32>} : memref<8x128xf32, #tpu.memory_space<vmem>>, vector<8x128xf32>,
    return
  }
  func.func @transform_0(%arg0: i32) -> (i32, i32) {
    %c0_i32 = arith.constant 0 : i32
    %c0_i32_0 = arith.constant 0 : i32
    return %arg0, %c0_i32 : i32, i32
  }
  func.func @transform_1(%arg0: i32) -> (i32, i32) {
    %c0_i32 = arith.constant 0 : i32
    %c0_i32_0 = arith.constant 0 : i32
    %c0_i32_1 = arith.constant 0 : i32
    return %c0_i32, %c0_i32_0 : i32, i32
  }
  func.func @transform_2(%arg0: i32) -> (i32, i32) {
    %c0_i32 = arith.constant 0 : i32
    %c0_i32_0 = arith.constant 0 : i32
    %c0_i32_1 = arith.constant 0 : i32
    return %c0_i32, %c0_i32_0 : i32, i32
  }
  func.func @transform_3(%arg0: i32) -> (i32, i32) {
    %c0_i32 = arith.constant 0 : i32
    %c0_i32_0 = arith.constant 0 : i32
    return %arg0, %c0_i32 : i32, i32
  }
}

</mosaic_0001>

<llo_original>
// kernel: tpu_custom_call.1
$region0: #{tpu_custom_call.1}
  #allocation0 [shape = 'u32[]', space=smem, size = 0x4, offset = 0x4, fixed_abs, tag = 'smem constant byte address 0x4 - core index']
  #allocation1 [shape = 'u32[144,128]{1,0:T(1,128)}', space=vmem, size = 0x12000, scoped, tag = 'internal scratch']
  %s0 = inlined_call_operand.hbm [shape: f32[32,64], index: 0, kind: input, shape index: {}]
  %s1 = inlined_call_operand.hbm [shape: f32[64,128], index: 1, kind: input, shape index: {}]
  %s2 = inlined_call_operand.vmem [shape: f32[1,128], index: 2, kind: input, shape index: {}]
  %s3 = inlined_call_operand.hbm [shape: f32[32,128], index: 3, kind: output, shape index: {}]
  %s4 = sld [smem:[#allocation0]]
  $region53: #{tpu_custom_call.1} parent=0
    _
  %s6 = ssub.s32 1, %s4
  %s7 = scalar_select 0, %s6, %s4
  $region1: #{tpu_custom_call.1} parent=0
    #allocation2 [shape = 'u8[8192]{0}', space=vmem, size = 0x2000, scoped, tag = 'input window, operand 0']
    #allocation3 [shape = 's32[2]{0}', space=sflag, size = 0x8, scoped, tag = 'scoped memory for tpu_custom_call.1']
    #allocation4 [shape = 's32[2]{0}', space=sflag, size = 0x8, scoped, tag = 'scoped memory for tpu_custom_call.1']
    #allocation5 [shape = 'u8[32768]{0}', space=vmem, size = 0x8000, scoped, tag = 'input window, operand 1, single buffered']
    #allocation6 [shape = 's32[1]{0}', space=sflag, size = 0x4, scoped, tag = 'scoped memory for tpu_custom_call.1']
    #allocation7 [shape = 'u8[8192]{0}', space=vmem, size = 0x2000, scoped, tag = 'output window, operand 0']
    %8 = vsyncpa [#allocation3], 0
    %s9 = scalar_lea.sflag [#allocation3], 1
    %10 = vsyncpa %s9, 0
    %11 = vsyncpa [#allocation6], 0
    %12 = vsyncpa [#allocation4], 0
    %s13 = scalar_lea.sflag [#allocation4], 1
    %14 = vsyncpa %s13, 0
    loop: start=0, step=1, limit=6
    $region2: #{tpu_custom_call.1} parent=1 // loop_pre_header
      _
    $region3: #{tpu_custom_call.1} parent=1 // loop_header
      %s16 = sphi 0, %s20
      %p17 = scmp.ge.s32.totalorder %s16, 6
      %s26 = sphi 0, %s28
      %s29 = sphi 0, %s26
      %s30 = sphi 0, %s29
      %s46 = sphi 0, %s30
      %s50 = sphi 0, %s50
      %s52 = sphi 0, %s50
      %s53 = sphi 0, %s52
      %s67 = sphi 0, %s53
      %s71 = sphi 0, %s71
      %s73 = sphi 0, %s71
      %s74 = sphi 0, %s73
      %s88 = sphi 0, %s74
      %s94 = sphi 0, %s96
      %s97 = sphi 0, %s94
      %s98 = sphi 0, %s97
      %s114 = sphi 0, %s98
    $region4: #{tpu_custom_call.1} parent=1 // loop_header_branch
      %19 = sbr.rel (%p17) target = $region8
    $region5: #{tpu_custom_call.1} parent=1 // loop_body
      %s21 = ssub.s32 %s16, 1
      %s22 = ssub.s32 %s16, 2
      %s23 = sadd.s32 %s16, 1
      %s24 = ssub.s32 %s16, %s23
      %p25 = scmp.eq.s32.totalorder %s24, 0
      %s27 = sadd.s32 %s26, 1
      %s28 = scalar_select %p25, %s26, %s27
      %p31 = pneg %p25
      %p32 = scmp.eq.s32.totalorder %s16, 3
      %p33 = por %p31, %p32
      %p34 = scmp.ne.s32.totalorder %s26, %s29
      %p35 = scmp.eq.s32.totalorder %s16, 0
      %p36 = por %p34, %p35
      %p37 = scmp.ne.s32.totalorder %s26, %s29
      %p38 = scmp.eq.s32.totalorder %s21, 3
      %p39 = por %p37, %p38
      %p40 = scmp.ne.s32.totalorder %s29, %s30
      %p41 = scmp.eq.s32.totalorder %s21, 0
      %p42 = por %p40, %p41
      %p43 = scmp.ne.s32.totalorder %s29, %s30
      %p44 = scmp.eq.s32.totalorder %s22, 3
      %p45 = por %p43, %p44
      %p47 = scmp.ne.s32.totalorder %s30, %s46
      %p48 = scmp.eq.s32.totalorder %s22, 0
      %p49 = por %p47, %p48
      %s51 = sadd.s32 %s50, 1
      %p54 = scmp.eq.s32.totalorder %s16, 3
      %p55 = scmp.ne.s32.totalorder %s50, %s52
      %p56 = scmp.eq.s32.totalorder %s16, 0
      %p57 = por %p55, %p56
      %p58 = scmp.ne.s32.totalorder %s50, %s52
      %p59 = scmp.eq.s32.totalorder %s21, 3
      %p60 = por %p58, %p59
      %p61 = scmp.ne.s32.totalorder %s52, %s53
      %p62 = scmp.eq.s32.totalorder %s21, 0
      %p63 = por %p61, %p62
      %p64 = scmp.ne.s32.totalorder %s52, %s53
      %p65 = scmp.eq.s32.totalorder %s22, 3
      %p66 = por %p64, %p65
      %p68 = scmp.ne.s32.totalorder %s53, %s67
      %p69 = scmp.eq.s32.totalorder %s22, 0
      %p70 = por %p68, %p69
      %s72 = sadd.s32 %s71, 1
      %p75 = scmp.eq.s32.totalorder %s16, 3
      %p76 = scmp.ne.s32.totalorder %s71, %s73
      %p77 = scmp.eq.s32.totalorder %s16, 0
      %p78 = por %p76, %p77
      %p79 = scmp.ne.s32.totalorder %s71, %s73
      %p80 = scmp.eq.s32.totalorder %s21, 3
      %p81 = por %p79, %p80
      %p82 = scmp.ne.s32.totalorder %s73, %s74
      %p83 = scmp.eq.s32.totalorder %s21, 0
      %p84 = por %p82, %p83
      %p85 = scmp.ne.s32.totalorder %s73, %s74
      %p86 = scmp.eq.s32.totalorder %s22, 3
      %p87 = por %p85, %p86
      %p89 = scmp.ne.s32.totalorder %s74, %s88
      %p90 = scmp.eq.s32.totalorder %s22, 0
      %p91 = por %p89, %p90
      %s92 = ssub.s32 %s16, %s23
      %p93 = scmp.eq.s32.totalorder %s92, 0
      %s95 = sadd.s32 %s94, 1
      %s96 = scalar_select %p93, %s94, %s95
      %p99 = pneg %p93
      %p100 = scmp.eq.s32.totalorder %s16, 3
      %p101 = por %p99, %p100
      %p102 = scmp.ne.s32.totalorder %s94, %s97
      %p103 = scmp.eq.s32.totalorder %s16, 0
      %p104 = por %p102, %p103
      %p105 = scmp.ne.s32.totalorder %s94, %s97
      %p106 = scmp.eq.s32.totalorder %s21, 3
      %p107 = por %p105, %p106
      %p108 = scmp.ne.s32.totalorder %s97, %s98
      %p109 = scmp.eq.s32.totalorder %s21, 0
      %p110 = por %p108, %p109
      %p111 = scmp.ne.s32.totalorder %s97, %s98
      %p112 = scmp.eq.s32.totalorder %s22, 3
      %p113 = por %p111, %p112
      %p115 = scmp.ne.s32.totalorder %s98, %s114
      %p116 = scmp.eq.s32.totalorder %s22, 0
      %p117 = por %p115, %p116
      %p118 = scmp.le.s32.totalorder 1, %s16
      %p119 = scmp.lt.s32.totalorder %s16, 5
      %p120 = pnand %p118, %p119
      %p121 = pneg %p120
      // Predicated region
      $region9: #{tpu_custom_call.1} parent=5 // pred_check
        _
      $region10: #{tpu_custom_call.1} parent=5 // pred_check_branch
        %123 = sbr.rel (%p120) target = $region12
      $region11: #{tpu_custom_call.1} parent=5 // pred_region
        %s124 = ssub.s32 %s16, 1
        // Predicated region
        $region13: #{tpu_custom_call.1} parent=11 // pred_check
          %p125 = pneg %p63
        $region14: #{tpu_custom_call.1} parent=11 // pred_check_branch
          %127 = sbr.rel (%p125) target = $region16
        $region15: #{tpu_custom_call.1} parent=11 // pred_region
          %s129 = ssub.s32 1024, 1024
          %130 = vsyncadd [#allocation6], %s129
          %s131 = sshll.u32 [#allocation5], 4
          %s132 = int_to_ptr.vmem [resolvable:$true] %s131
          %137 = dma.hbm_to_vmem [thread:$0]  %s1, 1024, %s132, [#allocation6], 128, 128, 8
        $region16: #{tpu_custom_call.1} parent=11 // pred_fallthru
          _
        // Predicated region
        $region17: #{tpu_custom_call.1} parent=11 // pred_check
          %p138 = pneg %p84
        $region18: #{tpu_custom_call.1} parent=11 // pred_check_branch
          %140 = sbr.rel (%p138) target = $region20
        $region19: #{tpu_custom_call.1} parent=11 // pred_region
          _
        $region20: #{tpu_custom_call.1} parent=11 // pred_fallthru
          _
      $region12: #{tpu_custom_call.1} parent=5 // pred_fallthru
        _
      %p141 = scmp.lt.s32.totalorder %s16, 4
      // Predicated region
      $region21: #{tpu_custom_call.1} parent=5 // pred_check
        %p142 = pneg %p141
      $region22: #{tpu_custom_call.1} parent=5 // pred_check_branch
        %144 = sbr.rel (%p142) target = $region24
      $region23: #{tpu_custom_call.1} parent=5 // pred_region
        // Predicated region
        $region25: #{tpu_custom_call.1} parent=23 // pred_check
          %p145 = pneg %p36
        $region26: #{tpu_custom_call.1} parent=23 // pred_check_branch
          %147 = sbr.rel (%p145) target = $region28
        $region27: #{tpu_custom_call.1} parent=23 // pred_region
          %s148 = sand.u32 %s26, 1
          %s149 = scalar_lea.sflag [#allocation3], %s148
          %s150 = sand.u32 %s26, 1
          %s151 = smul.addr %s150, 8
          %s152 = scalar_lea.vmem [#allocation2], %s151
          %s154 = ssub.s32 128, 128
          %155 = vsyncadd %s149, %s154
          %s156 = smul.addr %s16, 128
          %s157 = scalar_lea.hbm %s0, %s156
          %s159 = sshll.u32 %s152, 4
          %s160 = int_to_ptr.vmem [resolvable:$true] %s159
          %162 = dma.hbm_to_vmem [thread:$0]  %s157, 128, %s160, %s149
        $region28: #{tpu_custom_call.1} parent=23 // pred_fallthru
          _
      $region24: #{tpu_custom_call.1} parent=5 // pred_fallthru
        _
      %p163 = scmp.le.s32.totalorder 1, %s16
      %p164 = scmp.lt.s32.totalorder %s16, 5
      %p165 = pnand %p163, %p164
      %p166 = pneg %p165
      // Predicated region
      $region29: #{tpu_custom_call.1} parent=5 // pred_check
        _
      $region30: #{tpu_custom_call.1} parent=5 // pred_check_branch
        %168 = sbr.rel (%p165) target = $region32
      $region31: #{tpu_custom_call.1} parent=5 // pred_region
        %s169 = ssub.s32 %s16, 1
        %s170 = sand.u32 %s29, 1
        %s171 = scalar_lea.sflag [#allocation3], %s170
        %s172 = sand.u32 %s29, 1
        %s173 = smul.addr %s172, 8
        %s174 = scalar_lea.vmem [#allocation2], %s173
        // Predicated region
        $region33: #{tpu_custom_call.1} parent=31 // pred_check
          %p175 = pneg %p42
        $region34: #{tpu_custom_call.1} parent=31 // pred_check_branch
          %177 = sbr.rel (%p175) target = $region36
        $region35: #{tpu_custom_call.1} parent=31 // pred_region
          %178 = dma.done %s171, 128
        $region36: #{tpu_custom_call.1} parent=31 // pred_fallthru
          _
        // Predicated region
        $region37: #{tpu_custom_call.1} parent=31 // pred_check
          %p179 = pneg %p63
        $region38: #{tpu_custom_call.1} parent=31 // pred_check_branch
          %181 = sbr.rel (%p179) target = $region40
        $region39: #{tpu_custom_call.1} parent=31 // pred_region
          %182 = dma.done [#allocation6], 1024
        $region40: #{tpu_custom_call.1} parent=31 // pred_fallthru
          _
        %s183 = sand.u32 %s29, 1
        %s184 = scalar_lea.sflag [#allocation3], %s183
        %s185 = sand.u32 %s29, 1
        %s186 = smul.addr %s185, 8
        %s187 = scalar_lea.vmem [#allocation2], %s186
        %p188 = pneg %p42
        %p189 = pneg %p39
        %p190 = pneg %p63
        %p191 = pneg %p60
        %p192 = pneg %p84
        %p193 = pneg %p81
        %p194 = pneg %p110
        %p195 = pneg %p107
        %s196 = sand.u32 %s97, 1
        %s197 = scalar_lea.sflag [#allocation4], %s196
        %s198 = sand.u32 %s97, 1
        %s199 = smul.addr %s198, 8
        %s200 = scalar_lea.vmem [#allocation7], %s199
        %v201 = vld [vmem:[%s174] sm:$0xff]
        %v202 = vld [vmem:[#allocation5] sm:$0xff]
        %v203 = vld [vmem:[#allocation5 + $0x8] sm:$0xff]
        %v204 = vld [vmem:[#allocation5 + $0x10] sm:$0xff]
        %v205 = vld [vmem:[#allocation5 + $0x18] sm:$0xff]
        %v206 = vld [vmem:[#allocation5 + $0x20] sm:$0xff]
        %v207 = vld [vmem:[#allocation5 + $0x28] sm:$0xff]
        %v208 = vld [vmem:[#allocation5 + $0x30] sm:$0xff]
        %v209 = vld [vmem:[#allocation5 + $0x38] sm:$0xff]
        %v210 = vld [vmem:[%s2] sm:$0x1]
        %v212 = vlaneseq
        %v213 = vshrl.u32 %v212, 7
        %v214 = vsub.s32 0, %v213
        %v215 = vrot.slane %v210, %v214
        %vm217 = vcmask 523264
        %v219 = vsel %vm217, %v201, 0
        %221 = vmatprep.subr.mxu0 0.0
        %222 = vmatpush1.msra.mxu0 0.0
        %223 = vmatprep.subr.mxu0 0.0
        %224 = vmatpush1.msra.mxu0 0.0
        %225 = vmatprep.subr.mxu0 0.0
        %226 = vmatpush1.msra.mxu0 0.0
        %227 = vmatprep.subr.mxu0 0.0
        %228 = vmatpush1.msra.mxu0 0.0
        %229 = vmatprep.subr.mxu0 0.0
        %230 = vmatpush1.msra.mxu0 0.0
        %231 = vmatprep.subr.mxu0 0.0
        %232 = vmatpush1.msra.mxu0 0.0
        %233 = vmatprep.subr.mxu0 0.0
        %234 = vmatpush1.msra.mxu0 0.0
        %235 = vmatprep.subr.mxu0 0.0
        %236 = vmatpush1.msra.mxu0 0.0
        %237 = vmatprep.subr.mxu0 0.0
        %238 = vmatpush1.msra.mxu0 %v209
        %239 = vmatprep.subr.mxu0 0.0
        %240 = vmatpush1.msra.mxu0 %v208
        %241 = vmatprep.subr.mxu0 0.0
        %242 = vmatpush1.msra.mxu0 %v207
        %243 = vmatprep.subr.mxu0 0.0
        %244 = vmatpush1.msra.mxu0 %v206
        %245 = vmatprep.subr.mxu0 0.0
        %246 = vmatpush1.msra.mxu0 %v205
        %247 = vmatprep.subr.mxu0 0.0
        %248 = vmatpush1.msra.mxu0 %v204
        %249 = vmatprep.subr.mxu0 0.0
        %250 = vmatpush1.msra.mxu0 %v203
        %251 = vmatprep.subr.mxu0 0.0
        %252 = vmatpush1.msra.mxu0 %v202
        %253 = vmatprep.subr.mxu0 0.0
        %254 = vmatpush2.msra.mxu0 0.0
        %255 = vmatprep.subr.mxu0 0.0
        %256 = vmatpush2.msra.mxu0 0.0
        %257 = vmatprep.subr.mxu0 0.0
        %258 = vmatpush2.msra.mxu0 0.0
        %259 = vmatprep.subr.mxu0 0.0
        %260 = vmatpush2.msra.mxu0 0.0
        %261 = vmatprep.subr.mxu0 0.0
        %262 = vmatpush2.msra.mxu0 0.0
        %263 = vmatprep.subr.mxu0 0.0
        %264 = vmatpush2.msra.mxu0 0.0
        %265 = vmatprep.subr.mxu0 0.0
        %266 = vmatpush2.msra.mxu0 0.0
        %267 = vmatprep.subr.mxu0 0.0
        %268 = vmatpush2.msra.mxu0 0.0
        %269 = vmatprep.subr.mxu0 0.0
        %270 = vmatpush2.msra.mxu0 0.0
        %271 = vmatprep.subr.mxu0 0.0
        %272 = vmatpush2.msra.mxu0 0.0
        %273 = vmatprep.subr.mxu0 0.0
        %274 = vmatpush2.msra.mxu0 0.0
        %275 = vmatprep.subr.mxu0 0.0
        %276 = vmatpush2.msra.mxu0 0.0
        %277 = vmatprep.subr.mxu0 0.0
        %278 = vmatpush2.msra.mxu0 0.0
        %279 = vmatprep.subr.mxu0 0.0
        %280 = vmatpush2.msra.mxu0 0.0
        %281 = vmatprep.subr.mxu0 0.0
        %282 = vmatpush2.msra.mxu0 0.0
        %283 = vmatprep.subr.mxu0 0.0
        %284 = vmatpush2.msra.mxu0 0.0
        %285 = vmatprep.mubr.f32.mxu0 0.0
        %286 = vmatmul.mubr.f32.gmra.mxu0 %v219
        %v287 = vpop.f32.mrf.mxu0
        %v288 = vadd.f32 %v215, %v287
        %v289 = vpop.f32.mrf.mxu0
        %290 = vdwg.mxu0
        %291 = vst [vmem:[%s200] sm:$0xff] %v288
        %s292 = sand.u32 %s97, 1
        %s293 = scalar_lea.sflag [#allocation4], %s292
        %s294 = sand.u32 %s97, 1
        %s295 = smul.addr %s294, 8
        %s296 = scalar_lea.vmem [#allocation7], %s295
        // Predicated region
        $region41: #{tpu_custom_call.1} parent=31 // pred_check
          %p297 = pneg %p107
        $region42: #{tpu_custom_call.1} parent=31 // pred_check_branch
          %299 = sbr.rel (%p297) target = $region44
        $region43: #{tpu_custom_call.1} parent=31 // pred_region
          %s301 = ssub.s32 128, 128
          %302 = vsyncadd %s293, %s301
          %s303 = smul.addr %s21, 128
          %s304 = scalar_lea.hbm %s3, %s303
          %s306 = sshll.u32 %s296, 4
          %s307 = int_to_ptr.vmem [resolvable:$true] %s306
          %309 = dma.vmem_to_hbm [thread:$0]  %s307, 128, %s304, %s293
        $region44: #{tpu_custom_call.1} parent=31 // pred_fallthru
          _
      $region32: #{tpu_custom_call.1} parent=5 // pred_fallthru
        _
      %p310 = scmp.le.s32.totalorder 2, %s16
      // Predicated region
      $region45: #{tpu_custom_call.1} parent=5 // pred_check
        %p311 = pneg %p310
      $region46: #{tpu_custom_call.1} parent=5 // pred_check_branch
        %313 = sbr.rel (%p311) target = $region48
      $region47: #{tpu_custom_call.1} parent=5 // pred_region
        %s314 = ssub.s32 %s16, 2
        // Predicated region
        $region49: #{tpu_custom_call.1} parent=47 // pred_check
          %p315 = pneg %p113
        $region50: #{tpu_custom_call.1} parent=47 // pred_check_branch
          %317 = sbr.rel (%p315) target = $region52
        $region51: #{tpu_custom_call.1} parent=47 // pred_region
          %s318 = sand.u32 %s98, 1
          %s319 = scalar_lea.sflag [#allocation4], %s318
          %s320 = sand.u32 %s98, 1
          %s321 = smul.addr %s320, 8
          %s322 = scalar_lea.vmem [#allocation7], %s321
          %323 = dma.done %s319, 128
        $region52: #{tpu_custom_call.1} parent=47 // pred_fallthru
          _
      $region48: #{tpu_custom_call.1} parent=5 // pred_fallthru
        _
    $region6: #{tpu_custom_call.1} parent=1 // loop_footer
      %s20 = sadd.s32 1, %s16
    $region7: #{tpu_custom_call.1} parent=1 // loop_footer_branch
      %15 = sbr.rel target = $region3
    $region8: #{tpu_custom_call.1} parent=1 // loop_exit
      _
    %324 = vsyncpa [#allocation3], 1
    %s325 = scalar_lea.sflag [#allocation3], 1
    %326 = vsyncpa %s325, 1
    %327 = vsyncpa [#allocation6], 1
    %328 = vsyncpa [#allocation4], 1
    %s329 = scalar_lea.sflag [#allocation4], 1
    %330 = vsyncpa %s329, 1

</llo_original>
